<compile_context>
chip_gen: v6e
topology: v6e:2x2x1
jax: 0.10.0
libtpu: 0.0.40
codegen_flags: <defaults>
</compile_context>

<pallas_src>
import functools

import jax
import jax.numpy as jnp
from jax.experimental import pallas as pl
from jax.experimental.pallas import tpu as pltpu


def _round_up(x, m):
    return (x + m - 1) // m * m


def _cdiv(a, b):
    return (a + b - 1) // b


# ----------------------------------------------------------------------------
# Kernel 1: conv as channel-major matmul + per-block BN partial statistics.
#   y block  : (Cout, tile_s)    -- spatial axis lane-dense
#   stats    : per-(n, s-block) sum / sqsum over valid columns only
# ----------------------------------------------------------------------------
def _conv_stats_kernel(w_ref, p_ref, y_ref, sum_ref, sqsum_ref, *, s_total, tile_s):
    si = pl.program_id(1)
    w = w_ref[...]                                              # (Cout, K)
    p = p_ref[0]                                                # (K, tile_s)
    y = jnp.dot(w, p, preferred_element_type=jnp.float32)       # (Cout, tile_s) f32
    y_ref[0] = y                                                # Pallas masks ragged tail

    # Mask columns past S (unspecified HBM bytes in the ragged last block) so they
    # cannot poison the statistics.  jnp.where selects, so NaN/Inf never propagates.
    col = jax.lax.broadcasted_iota(jnp.int32, y.shape, 1)
    ym = jnp.where(col < (s_total - si * tile_s), y, 0.0)
    sum_ref[0, 0] = jnp.sum(ym, axis=1, keepdims=True)          # (Cout, 1)
    sqsum_ref[0, 0] = jnp.sum(ym * ym, axis=1, keepdims=True)   # (Cout, 1)


# ----------------------------------------------------------------------------
# Kernel 2: fused BatchNorm affine + ReLU, in place on the conv output.
# ----------------------------------------------------------------------------
def _bn_relu_kernel(y_ref, scale_ref, shift_ref, o_ref):
    o_ref[0] = jnp.maximum(y_ref[0] * scale_ref[...] + shift_ref[...], 0.0)


def down1_forward(x, conv_w, gamma, beta, eps=1e-5, max_tile_s=16384,
                  patch_dtype=jnp.float32):
    """x: [N, Cin, D, H, W] f32; conv_w: [Cout, Cin, 2, 2, 2]; gamma/beta: [Cout].

    patch_dtype=jnp.bfloat16 streams the patch matrix / weights at half width
    (f32 MXU accumulation, f32 y and statistics) -- recommended on v5e.
    """
    N, Cin, D, H, W = x.shape
    Cout = conv_w.shape[0]
    Do, Ho, Wo = D // 2, H // 2, W // 2
    S = Do * Ho * Wo              # spatial size per sample
    M = N * S                     # true BN count
    K = Cin * 8                   # patch length (ci, kd, kh, kw)

    # --- tile_s: spatial (lane) tile, multiple of 128, sized against a VMEM budget ---
    LANE = 128
    patch_bytes = jnp.dtype(patch_dtype).itemsize
    vmem_budget = 20 * 1024 * 1024                      # headroom under 32 MiB scoped VMEM
    per_col = 2 * max(patch_bytes * K + 4 * Cout,       # kernel 1: patch + y, double-buffered
                      8 * Cout)                         # kernel 2: y in + out, double-buffered
    max_cols = max(LANE, vmem_budget // per_col)
    tile_s = min(max_tile_s, max_cols, _round_up(S, LANE))
    tile_s = max(LANE, (tile_s // LANE) * LANE)
    # v7x megacore: make sure the (N, n_sb) parallel grid has >= 4 steps when possible.
    while N * _cdiv(S, tile_s) < 4 and tile_s > LANE:
        tile_s = max(LANE, ((tile_s // 2) // LANE) * LANE)
    n_sb = _cdiv(S, tile_s)

    # --- glue: channel-major patch matrix (N, K, S); free reshapes + ONE XLA transpose
    #     (cast to patch_dtype fuses into the transpose, halving its output when bf16) ---
    xv = x.reshape(N, Cin, Do, 2, Ho, 2, Wo, 2)
    p_t = xv.transpose(0, 1, 3, 5, 7, 2, 4, 6).reshape(N, K, S).astype(patch_dtype)
    w_t = conv_w.reshape(Cout, K).astype(patch_dtype)   # same (ci,kd,kh,kw) order

    cparams = pltpu.CompilerParams(
        dimension_semantics=("parallel", "parallel"),
        vmem_limit_bytes=32 * 1024 * 1024,   # safe on v7x; v6e could go higher if needed
    )

    # --- Pallas kernel 1: conv matmul + per-block BN partial sums ---
    kernel1 = functools.partial(_conv_stats_kernel, s_total=S, tile_s=tile_s)
    y_t, psum, psqsum = pl.pallas_call(
        kernel1,
        out_shape=(
            jax.ShapeDtypeStruct((N, Cout, S), jnp.float32),
            jax.ShapeDtypeStruct((N, n_sb, Cout, 1), jnp.float32),
            jax.ShapeDtypeStruct((N, n_sb, Cout, 1), jnp.float32),
        ),
        grid_spec=pltpu.PrefetchScalarGridSpec(
            num_scalar_prefetch=0,
            grid=(N, n_sb),
            in_specs=[
                pl.BlockSpec((Cout, K), lambda n, si: (0, 0)),
                pl.BlockSpec((1, K, tile_s), lambda n, si: (n, 0, si)),
            ],
            out_specs=[
                pl.BlockSpec((1, Cout, tile_s), lambda n, si: (n, 0, si)),
                pl.BlockSpec((1, 1, Cout, 1), lambda n, si: (n, si, 0, 0)),
                pl.BlockSpec((1, 1, Cout, 1), lambda n, si: (n, si, 0, 0)),
            ],
        ),
        compiler_params=cparams,
    )(w_t, p_t)

    # --- glue: Welford-style combine of per-block partials, fold BN into scale/shift ---
    cnt_blk = jnp.minimum(
        jnp.float32(tile_s),
        jnp.float32(S) - jnp.arange(n_sb, dtype=jnp.float32) * jnp.float32(tile_s),
    ).reshape(1, n_sb, 1)                                # (1, n_sb, 1) valid cols per block
    bsum = psum[..., 0]                                  # (N, n_sb, Cout)
    bsq = psqsum[..., 0]                                 # (N, n_sb, Cout)
    bmean = bsum / cnt_blk
    bM2 = bsq - bsum * bmean                             # per-block sum((y - mean_b)^2)
    total = jnp.float32(M)
    mean = jnp.sum(bsum, axis=(0, 1)) / total            # (Cout,)
    M2 = jnp.sum(bM2, axis=(0, 1)) + jnp.sum(cnt_blk * (bmean - mean) ** 2, axis=(0, 1))
    var = M2 / total                                     # biased var (PyTorch BN training)
    inv_std = jax.lax.rsqrt(var + eps)
    scale = (gamma * inv_std).reshape(Cout, 1).astype(jnp.float32)
    shift = (beta - mean * gamma * inv_std).reshape(Cout, 1).astype(jnp.float32)

    # --- Pallas kernel 2: BN apply + ReLU, aliased onto y_t (no new HBM buffer).
    #     Block shapes / index_maps kept in lockstep with kernel 1's y output. ---
    out_t = pl.pallas_call(
        _bn_relu_kernel,
        out_shape=jax.ShapeDtypeStruct((N, Cout, S), jnp.float32),
        grid_spec=pltpu.PrefetchScalarGridSpec(
            num_scalar_prefetch=0,
            grid=(N, n_sb),
            in_specs=[
                pl.BlockSpec((1, Cout, tile_s), lambda n, si: (n, 0, si)),
                pl.BlockSpec((Cout, 1), lambda n, si: (0, 0)),
                pl.BlockSpec((Cout, 1), lambda n, si: (0, 0)),
            ],
            out_specs=pl.BlockSpec((1, Cout, tile_s), lambda n, si: (n, 0, si)),
        ),
        compiler_params=cparams,
        input_output_aliases={0: 0},
    )(y_t, scale, shift)

    # --- reshape to NCDHW for free (no slice, no transpose) ---
    return out_t.reshape(N, Cout, Do, Ho, Wo)


def _reference(x, conv_w, gamma, beta, eps=1e-5):
    """Pure-JAX reference for sanity checking."""
    y = jax.lax.conv_general_dilated(
        x, conv_w, window_strides=(2, 2, 2), padding="VALID",
        dimension_numbers=("NCDHW", "OIDHW", "NCDHW"))
    mean = y.mean(axis=(0, 2, 3, 4), keepdims=True)
    var = y.var(axis=(0, 2, 3, 4), keepdims=True)   # biased
    y = (y - mean) / jnp.sqrt(var + eps)
    y = y * gamma.reshape(1, -1, 1, 1, 1) + beta.reshape(1, -1, 1, 1, 1)
    return jnp.maximum(y, 0.0)


if __name__ == "__main__":
    key = jax.random.PRNGKey(0)
    k_x, k_w, k_g, k_b = jax.random.split(key, 4)

    N, Cin, Cout = 2, 4, 8
    D = H = W = 16

    x = jax.random.normal(k_x, (N, Cin, D, H, W), dtype=jnp.float32)
    conv_w = jax.random.normal(k_w, (Cout, Cin, 2, 2, 2), dtype=jnp.float32) * 0.1
    gamma = 1.0 + 0.1 * jax.random.normal(k_g, (Cout,), dtype=jnp.float32)
    beta = 0.1 * jax.random.normal(k_b, (Cout,), dtype=jnp.float32)

    ref = jax.block_until_ready(_reference(x, conv_w, gamma, beta))

    # Default path: f32 end-to-end (matches the PyTorch module's numerics).
    fwd = jax.jit(down1_forward)   # jit so input_output_aliases reuses y's buffer
    out = jax.block_until_ready(fwd(x, conv_w, gamma, beta))
    assert out.shape == (N, Cout, D // 2, H // 2, W // 2), out.shape
    assert jnp.allclose(out, ref, atol=1e-3, rtol=1e-3), float(jnp.max(jnp.abs(out - ref)))

    # bf16-streaming path (v5e-oriented HBM saving); looser tolerance by construction.
    fwd_bf16 = jax.jit(functools.partial(down1_forward, patch_dtype=jnp.bfloat16))
    out_bf16 = jax.block_until_ready(fwd_bf16(x, conv_w, gamma, beta))
    assert jnp.allclose(out_bf16, ref, atol=5e-2, rtol=5e-2), \
        float(jnp.max(jnp.abs(out_bf16 - ref)))

    print("KERNEL_OK")
</pallas_src>

<mosaic_0001>
module attributes {stable_mosaic.version = 11 : i64} {
  func.func @_conv_stats_kernel(%arg0: i32, %arg1: i32, %arg2: memref<8x32xf32, #tpu.memory_space<vmem>>, %arg3: memref<1x32x256xf32, #tpu.memory_space<vmem>>, %arg4: memref<1x8x256xf32, #tpu.memory_space<vmem>>, %arg5: memref<1x1x8x1xf32, #tpu.memory_space<vmem>>, %arg6: memref<1x1x8x1xf32, #tpu.memory_space<vmem>>) attributes {dimension_semantics = [#tpu.dimension_semantics<parallel>, #tpu.dimension_semantics<parallel>], iteration_bounds = array<i64: 2, 2>, scalar_prefetch = 0 : i64, scratch_operands = 0 : i64, tpu.core_type = #tpu.core_type<tc>, window_params = [{pipeline_mode = #tpu.pipeline_mode<synchronous>, transform_indices = @transform_0, window_bounds = array<i64: 8, 32>}, {transform_indices = @transform_1, window_bounds = array<i64: 1, 32, 256>}, {transform_indices = @transform_2, window_bounds = array<i64: 1, 8, 256>}, {transform_indices = @transform_3, window_bounds = array<i64: 1, 1, 8, 1>}, {transform_indices = @transform_4, window_bounds = array<i64: 1, 1, 8, 1>}]} {
    %c0 = arith.constant 0 : index
    %c0_0 = arith.constant 0 : index
    %0 = vector.load %arg2[%c0, %c0_0] : memref<8x32xf32, #tpu.memory_space<vmem>>, vector<8x32xf32>
    %c0_1 = arith.constant 0 : index
    %c0_2 = arith.constant 0 : index
    %c0_3 = arith.constant 0 : index
    %1 = vector.load %arg3[%c0_1, %c0_2, %c0_3] : memref<1x32x256xf32, #tpu.memory_space<vmem>>, vector<1x32x256xf32>
    %2 = vector.shape_cast %1 : vector<1x32x256xf32> to vector<32x256xf32>
    %cst = arith.constant dense<0.000000e+00> : vector<8x256xf32>
    %3 = tpu.matmul %0, %2, %cst {dimension_numbers = #tpu.dot_dimension_numbers<[1], [0], [0], [1], [0, 0, 1, 1], [], []>} : vector<8x32xf32>, vector<32x256xf32>, vector<8x256xf32> -> vector<8x256xf32>
    %c0_4 = arith.constant 0 : index
    %c0_5 = arith.constant 0 : index
    %c0_6 = arith.constant 0 : index
    %4 = vector.load %arg4[%c0_4, %c0_5, %c0_6] : memref<1x8x256xf32, #tpu.memory_space<vmem>>, vector<1x8x256xf32>
    %5 = vector.shape_cast %4 : vector<1x8x256xf32> to vector<8x256xf32>
    %6 = vector.shape_cast %3 : vector<8x256xf32> to vector<1x8x256xf32>
    tpu.vector_store %arg4[%c0_4, %c0_5, %c0_6], %6 {strides = array<i32>} : memref<1x8x256xf32, #tpu.memory_space<vmem>>, vector<1x8x256xf32>,
    %7 = tpu.iota {dimensions = array<i32: 1>} : vector<8x256xi32>
    %c256_i32 = arith.constant 256 : i32
    %8 = arith.muli %arg1, %c256_i32 : i32
    %c512_i32 = arith.constant 512 : i32
    %9 = arith.subi %c512_i32, %8 : i32
    %10 = vector.broadcast %9 : i32 to vector<8x256xi32>
    %11 = arith.cmpi slt, %7, %10 : vector<8x256xi32>
    %cst_7 = arith.constant 0.000000e+00 : f32
    %12 = vector.broadcast %cst_7 : f32 to vector<8x256xf32>
    %13 = arith.select %11, %3, %12 : vector<8x256xi1>, vector<8x256xf32>
    %cst_8 = arith.constant dense<0.000000e+00> : vector<8xf32>
    %14 = vector.multi_reduction <add>, %13, %cst_8 [1] : vector<8x256xf32> to vector<8xf32>
    %15 = vector.shape_cast %14 : vector<8xf32> to vector<8x1xf32>
    %c0_9 = arith.constant 0 : index
    %c0_10 = arith.constant 0 : index
    %c0_11 = arith.constant 0 : index
    %c0_12 = arith.constant 0 : index
    %16 = vector.load %arg5[%c0_9, %c0_10, %c0_11, %c0_12] : memref<1x1x8x1xf32, #tpu.memory_space<vmem>>, vector<1x1x8x1xf32>
    %17 = vector.shape_cast %16 : vector<1x1x8x1xf32> to vector<8x1xf32>
    %18 = vector.shape_cast %15 : vector<8x1xf32> to vector<1x1x8x1xf32>
    tpu.vector_store %arg5[%c0_9, %c0_10, %c0_11, %c0_12], %18 {strides = array<i32>} : memref<1x1x8x1xf32, #tpu.memory_space<vmem>>, vector<1x1x8x1xf32>,
    %19 = arith.mulf %13, %13 : vector<8x256xf32>
    %cst_13 = arith.constant dense<0.000000e+00> : vector<8xf32>
    %20 = vector.multi_reduction <add>, %19, %cst_13 [1] : vector<8x256xf32> to vector<8xf32>
    %21 = vector.shape_cast %20 : vector<8xf32> to vector<8x1xf32>
    %c0_14 = arith.constant 0 : index
    %c0_15 = arith.constant 0 : index
    %c0_16 = arith.constant 0 : index
    %c0_17 = arith.constant 0 : index
    %22 = vector.load %arg6[%c0_14, %c0_15, %c0_16, %c0_17] : memref<1x1x8x1xf32, #tpu.memory_space<vmem>>, vector<1x1x8x1xf32>
    %23 = vector.shape_cast %22 : vector<1x1x8x1xf32> to vector<8x1xf32>
    %24 = vector.shape_cast %21 : vector<8x1xf32> to vector<1x1x8x1xf32>
    tpu.vector_store %arg6[%c0_14, %c0_15, %c0_16, %c0_17], %24 {strides = array<i32>} : memref<1x1x8x1xf32, #tpu.memory_space<vmem>>, vector<1x1x8x1xf32>,
    return
  }
  func.func @transform_0(%arg0: i32, %arg1: i32) -> (i32, i32) {
    %c0_i32 = arith.constant 0 : i32
    %c0_i32_0 = arith.constant 0 : i32
    %c0_i32_1 = arith.constant 0 : i32
    return %c0_i32, %c0_i32_0 : i32, i32
  }
  func.func @transform_1(%arg0: i32, %arg1: i32) -> (i32, i32, i32) {
    %c0_i32 = arith.constant 0 : i32
    %c0_i32_0 = arith.constant 0 : i32
    return %arg0, %c0_i32, %arg1 : i32, i32, i32
  }
  func.func @transform_2(%arg0: i32, %arg1: i32) -> (i32, i32, i32) {
    %c0_i32 = arith.constant 0 : i32
    %c0_i32_0 = arith.constant 0 : i32
    return %arg0, %c0_i32, %arg1 : i32, i32, i32
  }
  func.func @transform_3(%arg0: i32, %arg1: i32) -> (i32, i32, i32, i32) {
    %c0_i32 = arith.constant 0 : i32
    %c0_i32_0 = arith.constant 0 : i32
    %c0_i32_1 = arith.constant 0 : i32
    return %arg0, %arg1, %c0_i32, %c0_i32_0 : i32, i32, i32, i32
  }
  func.func @transform_4(%arg0: i32, %arg1: i32) -> (i32, i32, i32, i32) {
    %c0_i32 = arith.constant 0 : i32
    %c0_i32_0 = arith.constant 0 : i32
    %c0_i32_1 = arith.constant 0 : i32
    return %arg0, %arg1, %c0_i32, %c0_i32_0 : i32, i32, i32, i32
  }
}

module attributes {stable_mosaic.version = 11 : i64} {
  func.func @_bn_relu_kernel(%arg0: i32, %arg1: i32, %arg2: memref<1x8x256xf32, #tpu.memory_space<vmem>>, %arg3: memref<8x1xf32, #tpu.memory_space<vmem>>, %arg4: memref<8x1xf32, #tpu.memory_space<vmem>>, %arg5: memref<1x8x256xf32, #tpu.memory_space<vmem>>) attributes {dimension_semantics = [#tpu.dimension_semantics<parallel>, #tpu.dimension_semantics<parallel>], iteration_bounds = array<i64: 2, 2>, scalar_prefetch = 0 : i64, scratch_operands = 0 : i64, tpu.core_type = #tpu.core_type<tc>, window_params = [{transform_indices = @transform_0, window_bounds = array<i64: 1, 8, 256>}, {pipeline_mode = #tpu.pipeline_mode<synchronous>, transform_indices = @transform_1, window_bounds = array<i64: 8, 1>}, {pipeline_mode = #tpu.pipeline_mode<synchronous>, transform_indices = @transform_2, window_bounds = array<i64: 8, 1>}, {transform_indices = @transform_3, window_bounds = array<i64: 1, 8, 256>}]} {
    %c0 = arith.constant 0 : index
    %c0_0 = arith.constant 0 : index
    %c0_1 = arith.constant 0 : index
    %0 = vector.load %arg2[%c0, %c0_0, %c0_1] : memref<1x8x256xf32, #tpu.memory_space<vmem>>, vector<1x8x256xf32>
    %1 = vector.shape_cast %0 : vector<1x8x256xf32> to vector<8x256xf32>
    %c0_2 = arith.constant 0 : index
    %c0_3 = arith.constant 0 : index
    %2 = vector.load %arg3[%c0_2, %c0_3] : memref<8x1xf32, #tpu.memory_space<vmem>>, vector<8x1xf32>
    %3 = vector.broadcast %2 : vector<8x1xf32> to vector<8x256xf32>
    %4 = arith.mulf %1, %3 : vector<8x256xf32>
    %c0_4 = arith.constant 0 : index
    %c0_5 = arith.constant 0 : index
    %5 = vector.load %arg4[%c0_4, %c0_5] : memref<8x1xf32, #tpu.memory_space<vmem>>, vector<8x1xf32>
    %6 = vector.broadcast %5 : vector<8x1xf32> to vector<8x256xf32>
    %7 = arith.addf %4, %6 : vector<8x256xf32>
    %cst = arith.constant 0.000000e+00 : f32
    %8 = vector.broadcast %cst : f32 to vector<8x256xf32>
    %9 = arith.maximumf %7, %8 : vector<8x256xf32>
    %c0_6 = arith.constant 0 : index
    %c0_7 = arith.constant 0 : index
    %c0_8 = arith.constant 0 : index
    %10 = vector.load %arg5[%c0_6, %c0_7, %c0_8] : memref<1x8x256xf32, #tpu.memory_space<vmem>>, vector<1x8x256xf32>
    %11 = vector.shape_cast %10 : vector<1x8x256xf32> to vector<8x256xf32>
    %12 = vector.shape_cast %9 : vector<8x256xf32> to vector<1x8x256xf32>
    tpu.vector_store %arg5[%c0_6, %c0_7, %c0_8], %12 {strides = array<i32>} : memref<1x8x256xf32, #tpu.memory_space<vmem>>, vector<1x8x256xf32>,
    return
  }
  func.func @transform_0(%arg0: i32, %arg1: i32) -> (i32, i32, i32) {
    %c0_i32 = arith.constant 0 : i32
    %c0_i32_0 = arith.constant 0 : i32
    return %arg0, %c0_i32, %arg1 : i32, i32, i32
  }
  func.func @transform_1(%arg0: i32, %arg1: i32) -> (i32, i32) {
    %c0_i32 = arith.constant 0 : i32
    %c0_i32_0 = arith.constant 0 : i32
    %c0_i32_1 = arith.constant 0 : i32
    return %c0_i32, %c0_i32_0 : i32, i32
  }
  func.func @transform_2(%arg0: i32, %arg1: i32) -> (i32, i32) {
    %c0_i32 = arith.constant 0 : i32
    %c0_i32_0 = arith.constant 0 : i32
    %c0_i32_1 = arith.constant 0 : i32
    return %c0_i32, %c0_i32_0 : i32, i32
  }
  func.func @transform_3(%arg0: i32, %arg1: i32) -> (i32, i32, i32) {
    %c0_i32 = arith.constant 0 : i32
    %c0_i32_0 = arith.constant 0 : i32
    return %arg0, %c0_i32, %arg1 : i32, i32, i32
  }
}

</mosaic_0001>

<llo_original>
// kernel: down1_forward.2
$region0: #{down1_forward.2}
  #allocation0 [shape = 'u32[]', space=smem, size = 0x4, offset = 0x4, fixed_abs, tag = 'smem constant byte address 0x4 - core index']
  #allocation1 [shape = 'u32[144,128]{1,0:T(1,128)}', space=vmem, size = 0x12000, scoped, tag = 'internal scratch']
  %s0 = inlined_call_operand.vmem [shape: f32[8,32], index: 0, kind: input, shape index: {}]
  %s1 = inlined_call_operand.vmem [shape: f32[2,32,512], index: 1, kind: input, shape index: {}]
  %s2 = inlined_call_operand.vmem [shape: f32[2,8,512], index: 2, kind: output, shape index: {0}]
  %s3 = inlined_call_operand.vmem [shape: f32[2,2,8,1], index: 3, kind: output, shape index: {1}]
  %s4 = inlined_call_operand.vmem [shape: f32[2,2,8,1], index: 4, kind: output, shape index: {2}]
  %5 = xla_tuple %s2, %s3, %s4
  %s6 = sld [smem:[#allocation0]]
  $region80: #{down1_forward.2} parent=0
    _
  %s8 = ssub.s32 1, %s6
  %s9 = scalar_select 0, %s8, %s6
  $region1: #{down1_forward.2} parent=0
    #allocation2 [shape = 'u8[65536]{0}', space=vmem, size = 0x10000, scoped, tag = 'input window, operand 1']
    loop: start=0, step=1, limit=6
    $region2: #{down1_forward.2} parent=1 // loop_pre_header
      _
    $region3: #{down1_forward.2} parent=1 // loop_header
      %s11 = sphi 0, %s15
      %p12 = scmp.ge.s32.totalorder %s11, 6
      %s18 = sphi 0, %s30
      %s19 = sphi 0, %s26
      %s20 = sphi 0, %s18
      %s21 = sphi 0, %s19
      %s22 = sphi 0, %s20
      %s23 = sphi 0, %s21
      %s31 = sphi 0, %s31
      %s33 = sphi 0, %s31
      %s34 = sphi 0, %s33
      %s48 = sphi 0, %s34
      %s56 = sphi 0, %s58
      %s59 = sphi 0, %s56
      %s60 = sphi 0, %s59
      %s76 = sphi 0, %s60
      %s84 = sphi 0, %s86
      %s87 = sphi 0, %s84
      %s88 = sphi 0, %s87
      %s104 = sphi 0, %s88
      %s112 = sphi 0, %s114
      %s115 = sphi 0, %s112
      %s116 = sphi 0, %s115
      %s132 = sphi 0, %s116
      %s140 = sphi 0, %s142
      %s143 = sphi 0, %s140
      %s144 = sphi 0, %s143
      %s160 = sphi 0, %s144
    $region4: #{down1_forward.2} parent=1 // loop_header_branch
      %14 = sbr.rel (%p12) target = $region8
    $region5: #{down1_forward.2} parent=1 // loop_body
      %s16 = ssub.s32 %s11, 1
      %s17 = ssub.s32 %s11, 2
      %s24 = sadd.s32 1, %s19
      %p25 = scmp.ge.s32.totalorder %s24, 2
      %s26 = scalar_select %p25, 0, %s24
      %s27 = sadd.s32 1, %s18
      %s28 = scalar_select %p25, %s27, %s18
      %p29 = scmp.ge.s32.totalorder %s28, 2
      %s30 = scalar_select %p29, 0, %s28
      %s32 = sadd.s32 %s31, 1
      %p35 = scmp.eq.s32.totalorder %s11, 3
      %p36 = scmp.ne.s32.totalorder %s31, %s33
      %p37 = scmp.eq.s32.totalorder %s11, 0
      %p38 = por %p36, %p37
      %p39 = scmp.ne.s32.totalorder %s31, %s33
      %p40 = scmp.eq.s32.totalorder %s16, 3
      %p41 = por %p39, %p40
      %p42 = scmp.ne.s32.totalorder %s33, %s34
      %p43 = scmp.eq.s32.totalorder %s16, 0
      %p44 = por %p42, %p43
      %p45 = scmp.ne.s32.totalorder %s33, %s34
      %p46 = scmp.eq.s32.totalorder %s17, 3
      %p47 = por %p45, %p46
      %p49 = scmp.ne.s32.totalorder %s34, %s48
      %p50 = scmp.eq.s32.totalorder %s17, 0
      %p51 = por %p49, %p50
      %s52 = ssub.s32 %s18, %s30
      %s53 = ssub.s32 %s19, %s26
      %s54 = sor.u32 %s52, %s53
      %p55 = scmp.eq.s32.totalorder %s54, 0
      %s57 = sadd.s32 %s56, 1
      %s58 = scalar_select %p55, %s56, %s57
      %p61 = pneg %p55
      %p62 = scmp.eq.s32.totalorder %s11, 3
      %p63 = por %p61, %p62
      %p64 = scmp.ne.s32.totalorder %s56, %s59
      %p65 = scmp.eq.s32.totalorder %s11, 0
      %p66 = por %p64, %p65
      %p67 = scmp.ne.s32.totalorder %s56, %s59
      %p68 = scmp.eq.s32.totalorder %s16, 3
      %p69 = por %p67, %p68
      %p70 = scmp.ne.s32.totalorder %s59, %s60
      %p71 = scmp.eq.s32.totalorder %s16, 0
      %p72 = por %p70, %p71
      %p73 = scmp.ne.s32.totalorder %s59, %s60
      %p74 = scmp.eq.s32.totalorder %s17, 3
      %p75 = por %p73, %p74
      %p77 = scmp.ne.s32.totalorder %s60, %s76
      %p78 = scmp.eq.s32.totalorder %s17, 0
      %p79 = por %p77, %p78
      %s80 = ssub.s32 %s18, %s30
      %s81 = ssub.s32 %s19, %s26
      %s82 = sor.u32 %s80, %s81
      %p83 = scmp.eq.s32.totalorder %s82, 0
      %s85 = sadd.s32 %s84, 1
      %s86 = scalar_select %p83, %s84, %s85
      %p89 = pneg %p83
      %p90 = scmp.eq.s32.totalorder %s11, 3
      %p91 = por %p89, %p90
      %p92 = scmp.ne.s32.totalorder %s84, %s87
      %p93 = scmp.eq.s32.totalorder %s11, 0
      %p94 = por %p92, %p93
      %p95 = scmp.ne.s32.totalorder %s84, %s87
      %p96 = scmp.eq.s32.totalorder %s16, 3
      %p97 = por %p95, %p96
      %p98 = scmp.ne.s32.totalorder %s87, %s88
      %p99 = scmp.eq.s32.totalorder %s16, 0
      %p100 = por %p98, %p99
      %p101 = scmp.ne.s32.totalorder %s87, %s88
      %p102 = scmp.eq.s32.totalorder %s17, 3
      %p103 = por %p101, %p102
      %p105 = scmp.ne.s32.totalorder %s88, %s104
      %p106 = scmp.eq.s32.totalorder %s17, 0
      %p107 = por %p105, %p106
      %s108 = ssub.s32 %s18, %s30
      %s109 = ssub.s32 %s19, %s26
      %s110 = sor.u32 %s108, %s109
      %p111 = scmp.eq.s32.totalorder %s110, 0
      %s113 = sadd.s32 %s112, 1
      %s114 = scalar_select %p111, %s112, %s113
      %p117 = pneg %p111
      %p118 = scmp.eq.s32.totalorder %s11, 3
      %p119 = por %p117, %p118
      %p120 = scmp.ne.s32.totalorder %s112, %s115
      %p121 = scmp.eq.s32.totalorder %s11, 0
      %p122 = por %p120, %p121
      %p123 = scmp.ne.s32.totalorder %s112, %s115
      %p124 = scmp.eq.s32.totalorder %s16, 3
      %p125 = por %p123, %p124
      %p126 = scmp.ne.s32.totalorder %s115, %s116
      %p127 = scmp.eq.s32.totalorder %s16, 0
      %p128 = por %p126, %p127
      %p129 = scmp.ne.s32.totalorder %s115, %s116
      %p130 = scmp.eq.s32.totalorder %s17, 3
      %p131 = por %p129, %p130
      %p133 = scmp.ne.s32.totalorder %s116, %s132
      %p134 = scmp.eq.s32.totalorder %s17, 0
      %p135 = por %p133, %p134
      %s136 = ssub.s32 %s18, %s30
      %s137 = ssub.s32 %s19, %s26
      %s138 = sor.u32 %s136, %s137
      %p139 = scmp.eq.s32.totalorder %s138, 0
      %s141 = sadd.s32 %s140, 1
      %s142 = scalar_select %p139, %s140, %s141
      %p145 = pneg %p139
      %p146 = scmp.eq.s32.totalorder %s11, 3
      %p147 = por %p145, %p146
      %p148 = scmp.ne.s32.totalorder %s140, %s143
      %p149 = scmp.eq.s32.totalorder %s11, 0
      %p150 = por %p148, %p149
      %p151 = scmp.ne.s32.totalorder %s140, %s143
      %p152 = scmp.eq.s32.totalorder %s16, 3
      %p153 = por %p151, %p152
      %p154 = scmp.ne.s32.totalorder %s143, %s144
      %p155 = scmp.eq.s32.totalorder %s16, 0
      %p156 = por %p154, %p155
      %p157 = scmp.ne.s32.totalorder %s143, %s144
      %p158 = scmp.eq.s32.totalorder %s17, 3
      %p159 = por %p157, %p158
      %p161 = scmp.ne.s32.totalorder %s144, %s160
      %p162 = scmp.eq.s32.totalorder %s17, 0
      %p163 = por %p161, %p162
      %p164 = scmp.le.s32.totalorder 1, %s11
      %p165 = scmp.lt.s32.totalorder %s11, 5
      %p166 = pnand %p164, %p165
      %p167 = pneg %p166
      // Predicated region
      $region9: #{down1_forward.2} parent=5 // pred_check
        _
      $region10: #{down1_forward.2} parent=5 // pred_check_branch
        %169 = sbr.rel (%p166) target = $region12
      $region11: #{down1_forward.2} parent=5 // pred_region
        %s170 = ssub.s32 %s11, 1
        // Predicated region
        $region13: #{down1_forward.2} parent=11 // pred_check
          %p171 = pneg %p44
        $region14: #{down1_forward.2} parent=11 // pred_check_branch
          %173 = sbr.rel (%p171) target = $region16
        $region15: #{down1_forward.2} parent=11 // pred_region
          _
        $region16: #{down1_forward.2} parent=11 // pred_fallthru
          _
      $region12: #{down1_forward.2} parent=5 // pred_fallthru
        _
      %p174 = scmp.lt.s32.totalorder %s11, 4
      // Predicated region
      $region17: #{down1_forward.2} parent=5 // pred_check
        %p175 = pneg %p174
      $region18: #{down1_forward.2} parent=5 // pred_check_branch
        %177 = sbr.rel (%p175) target = $region20
      $region19: #{down1_forward.2} parent=5 // pred_region
        // Predicated region
        $region21: #{down1_forward.2} parent=19 // pred_check
          %p178 = pneg %p66
        $region22: #{down1_forward.2} parent=19 // pred_check_branch
          %180 = sbr.rel (%p178) target = $region24
        $region23: #{down1_forward.2} parent=19 // pred_region
          %s181 = sand.u32 %s56, 1
          %s182 = sand.u32 %s56, 1
          %s183 = smul.addr %s182, 64
          %s184 = scalar_lea.vmem [#allocation2], %s183
          %s185 = smul.u32 2, %s19
          %s186 = smul.addr %s18, 16
          %s187 = sadd.s32 %s185, %s186
          %s188 = smul.addr %s187, 8
          %s189 = scalar_lea.vmem %s1, %s188
          // Predicated region
          $region25: #{down1_forward.2} parent=23 // pred_check
            _
          $region26: #{down1_forward.2} parent=23 // pred_check_branch
            %191 = sbr.rel (0) target = $region28
          $region27: #{down1_forward.2} parent=23 // pred_region
            // Predicated region
            $region29: #{down1_forward.2} parent=27 // pred_check
              _
            $region30: #{down1_forward.2} parent=27 // pred_check_branch
              %193 = sbr.rel (0) target = $region32
            $region31: #{down1_forward.2} parent=27 // pred_region
              loop: start=0, step=1, limit=1
              $region33: #{down1_forward.2} parent=31 // loop_pre_header
                _
              $region34: #{down1_forward.2} parent=31 // loop_header
                %s195 = sphi 0, %s199
                %p196 = scmp.ge.s32.totalorder %s195, 1
                %s200 = sphi %s189, %s189
                %s201 = sphi %s184, %s184
              $region35: #{down1_forward.2} parent=31 // loop_header_branch
                %198 = sbr.rel (%p196) target = $region39
              $region36: #{down1_forward.2} parent=31 // loop_body
                %v202 = vld [vmem:[%s200] sm:$0xff]
                %203 = vst [vmem:[%s201] sm:$0xff] %v202
                %v204 = vld [vmem:[%s200 + $0x8] sm:$0xff]
                %205 = vst [vmem:[%s201 + $0x8] sm:$0xff] %v204
                %v206 = vld [vmem:[%s200 + $0x20] sm:$0xff]
                %207 = vst [vmem:[%s201 + $0x10] sm:$0xff] %v206
                %v208 = vld [vmem:[%s200 + $0x28] sm:$0xff]
                %209 = vst [vmem:[%s201 + $0x18] sm:$0xff] %v208
                %v210 = vld [vmem:[%s200 + $0x40] sm:$0xff]
                %211 = vst [vmem:[%s201 + $0x20] sm:$0xff] %v210
                %v212 = vld [vmem:[%s200 + $0x48] sm:$0xff]
                %213 = vst [vmem:[%s201 + $0x28] sm:$0xff] %v212
                %v214 = vld [vmem:[%s200 + $0x60] sm:$0xff]
                %215 = vst [vmem:[%s201 + $0x30] sm:$0xff] %v214
                %v216 = vld [vmem:[%s200 + $0x68] sm:$0xff]
                %217 = vst [vmem:[%s201 + $0x38] sm:$0xff] %v216
              $region37: #{down1_forward.2} parent=31 // loop_footer
                %s199 = sadd.s32 1, %s195
              $region38: #{down1_forward.2} parent=31 // loop_footer_branch
                %194 = sbr.rel target = $region34
              $region39: #{down1_forward.2} parent=31 // loop_exit
                _
            $region32: #{down1_forward.2} parent=27 // pred_fallthru
              _
            // Predicated region
            $region40: #{down1_forward.2} parent=27 // pred_check
              _
            $region41: #{down1_forward.2} parent=27 // pred_check_branch
              %219 = sbr.rel target = $region43
            $region42: #{down1_forward.2} parent=27 // pred_region
              _
            $region43: #{down1_forward.2} parent=27 // pred_fallthru
              _
          $region28: #{down1_forward.2} parent=23 // pred_fallthru
            _
          %220 = vnop
        $region24: #{down1_forward.2} parent=19 // pred_fallthru
          _
      $region20: #{down1_forward.2} parent=5 // pred_fallthru
        _
      %p221 = scmp.le.s32.totalorder 1, %s11
      %p222 = scmp.lt.s32.totalorder %s11, 5
      %p223 = pnand %p221, %p222
      %p224 = pneg %p223
      // Predicated region
      $region44: #{down1_forward.2} parent=5 // pred_check
        _
      $region45: #{down1_forward.2} parent=5 // pred_check_branch
        %226 = sbr.rel (%p223) target = $region47
      $region46: #{down1_forward.2} parent=5 // pred_region
        %s227 = ssub.s32 %s11, 1
        %s228 = sand.u32 %s59, 1
        %s229 = sand.u32 %s59, 1
        %s230 = smul.addr %s229, 64
        %s231 = scalar_lea.vmem [#allocation2], %s230
        // Predicated region
        $region48: #{down1_forward.2} parent=46 // pred_check
          %p232 = pneg %p72
        $region49: #{down1_forward.2} parent=46 // pred_check_branch
          %234 = sbr.rel (%p232) target = $region51
        $region50: #{down1_forward.2} parent=46 // pred_region
          _
        $region51: #{down1_forward.2} parent=46 // pred_fallthru
          _
        %p235 = pneg %p44
        %p236 = pneg %p41
        %s237 = sand.u32 %s59, 1
        %s238 = sand.u32 %s59, 1
        %s239 = smul.addr %s238, 64
        %s240 = scalar_lea.vmem [#allocation2], %s239
        %p241 = pneg %p72
        %p242 = pneg %p69
        %p243 = pneg %p100
        %p244 = pneg %p97
        %s245 = smul.u32 2, %s21
        %p246 = scmp.lt.s32.totalorder %s20, 1
        %s247 = scalar_select %p246, %s20, 1
        %p248 = scmp.lt.s32.totalorder %s245, 3
        %s249 = scalar_select %p248, %s245, 3
        %s250 = smul.addr %s247, 4
        %s251 = sadd.s32 %s249, %s250
        %s252 = smul.addr %s251, 8
        %s253 = scalar_lea.vmem %s2, %s252
        %p254 = pneg %p128
        %p255 = pneg %p125
        %p256 = scmp.lt.s32.totalorder %s20, 1
        %s257 = scalar_select %p256, %s20, 1
        %p258 = scmp.lt.s32.totalorder %s21, 1
        %s259 = scalar_select %p258, %s21, 1
        %s260 = smul.addr %s257, 2
        %s261 = sadd.s32 %s259, %s260
        %s262 = smul.addr %s261, 8
        %s263 = scalar_lea.vmem %s3, %s262
        %p264 = pneg %p156
        %p265 = pneg %p153
        %p266 = scmp.lt.s32.totalorder %s20, 1
        %s267 = scalar_select %p266, %s20, 1
        %p268 = scmp.lt.s32.totalorder %s21, 1
        %s269 = scalar_select %p268, %s21, 1
        %s270 = smul.addr %s267, 2
        %s271 = sadd.s32 %s269, %s270
        %s272 = smul.addr %s271, 8
        %s273 = scalar_lea.vmem %s4, %s272
        %s274 = smul.u32 2, %s21
        %s275 = smul.u32 2, %s21
        %p276 = scmp.lt.s32.totalorder %s20, 1
        %s277 = scalar_select %p276, %s20, 1
        %p278 = scmp.lt.s32.totalorder %s275, 3
        %s279 = scalar_select %p278, %s275, 3
        %s280 = smul.addr %s277, 4
        %s281 = sadd.s32 %s279, %s280
        %s282 = smul.addr %s281, 8
        %s283 = scalar_lea.vmem %s2, %s282
        %s284 = smul.u32 2, %s21
        %p285 = scmp.lt.s32.totalorder %s20, 1
        %s286 = scalar_select %p285, %s20, 1
        %p287 = scmp.lt.s32.totalorder %s21, 1
        %s288 = scalar_select %p287, %s21, 1
        %s289 = smul.addr %s286, 2
        %s290 = sadd.s32 %s288, %s289
        %s291 = smul.addr %s290, 8
        %s292 = scalar_lea.vmem %s3, %s291
        %p293 = scmp.lt.s32.totalorder %s20, 1
        %s294 = scalar_select %p293, %s20, 1
        %p295 = scmp.lt.s32.totalorder %s21, 1
        %s296 = scalar_select %p295, %s21, 1
        %s297 = smul.addr %s294, 2
        %s298 = sadd.s32 %s296, %s297
        %s299 = smul.addr %s298, 8
        %s300 = scalar_lea.vmem %s4, %s299
        %v301 = vld [vmem:[%s0] sm:$0xff]
        %v302 = vld [vmem:[%s231] sm:$0xff]
        %v303 = vld [vmem:[%s231 + $0x8] sm:$0xff]
        %v304 = vld [vmem:[%s231 + $0x10] sm:$0xff]
        %v305 = vld [vmem:[%s231 + $0x18] sm:$0xff]
        %v306 = vld [vmem:[%s231 + $0x20] sm:$0xff]
        %v307 = vld [vmem:[%s231 + $0x28] sm:$0xff]
        %v308 = vld [vmem:[%s231 + $0x30] sm:$0xff]
        %v309 = vld [vmem:[%s231 + $0x38] sm:$0xff]
        %vm310 = vcmask 261120
        %v312 = vsel %vm310, %v301, 0
        %314 = vmatprep.subr.mxu0 0.0
        %315 = vmatpush1.msra.mxu0 0.0
        %316 = vmatprep.subr.mxu0 0.0
        %317 = vmatpush1.msra.mxu0 0.0
        %318 = vmatprep.subr.mxu0 0.0
        %319 = vmatpush1.msra.mxu0 0.0
        %320 = vmatprep.subr.mxu0 0.0
        %321 = vmatpush1.msra.mxu0 0.0
        %322 = vmatprep.subr.mxu0 0.0
        %323 = vmatpush1.msra.mxu0 0.0
        %324 = vmatprep.subr.mxu0 0.0
        %325 = vmatpush1.msra.mxu0 0.0
        %326 = vmatprep.subr.mxu0 0.0
        %327 = vmatpush1.msra.mxu0 0.0
        %328 = vmatprep.subr.mxu0 0.0
        %329 = vmatpush1.msra.mxu0 0.0
        %330 = vmatprep.subr.mxu0 0.0
        %331 = vmatpush1.msra.mxu0 0.0
        %332 = vmatprep.subr.mxu0 0.0
        %333 = vmatpush1.msra.mxu0 0.0
        %334 = vmatprep.subr.mxu0 0.0
        %335 = vmatpush1.msra.mxu0 0.0
        %336 = vmatprep.subr.mxu0 0.0
        %337 = vmatpush1.msra.mxu0 0.0
        %338 = vmatprep.subr.mxu0 %v309
        %339 = vmatpush1.msra.mxu0 %v308
        %340 = vmatprep.subr.mxu0 %v307
        %341 = vmatpush1.msra.mxu0 %v306
        %342 = vmatprep.subr.mxu0 %v305
        %343 = vmatpush1.msra.mxu0 %v304
        %344 = vmatprep.subr.mxu0 %v303
        %345 = vmatpush1.msra.mxu0 %v302
        %346 = vmatprep.subr.mxu0 0.0
        %347 = vmatpush2.msra.mxu0 0.0
        %348 = vmatprep.subr.mxu0 0.0
        %349 = vmatpush2.msra.mxu0 0.0
        %350 = vmatprep.subr.mxu0 0.0
        %351 = vmatpush2.msra.mxu0 0.0
        %352 = vmatprep.subr.mxu0 0.0
        %353 = vmatpush2.msra.mxu0 0.0
        %354 = vmatprep.subr.mxu0 0.0
        %355 = vmatpush2.msra.mxu0 0.0
        %356 = vmatprep.subr.mxu0 0.0
        %357 = vmatpush2.msra.mxu0 0.0
        %358 = vmatprep.subr.mxu0 0.0
        %359 = vmatpush2.msra.mxu0 0.0
        %360 = vmatprep.subr.mxu0 0.0
        %361 = vmatpush2.msra.mxu0 0.0
        %362 = vmatprep.subr.mxu0 0.0
        %363 = vmatpush2.msra.mxu0 0.0
        %364 = vmatprep.subr.mxu0 0.0
        %365 = vmatpush2.msra.mxu0 0.0
        %366 = vmatprep.subr.mxu0 0.0
        %367 = vmatpush2.msra.mxu0 0.0
        %368 = vmatprep.subr.mxu0 0.0
        %369 = vmatpush2.msra.mxu0 0.0
        %370 = vmatprep.subr.mxu0 0.0
        %371 = vmatpush2.msra.mxu0 0.0
        %372 = vmatprep.subr.mxu0 0.0
        %373 = vmatpush2.msra.mxu0 0.0
        %374 = vmatprep.subr.mxu0 0.0
        %375 = vmatpush2.msra.mxu0 0.0
        %376 = vmatprep.subr.mxu0 0.0
        %377 = vmatpush2.msra.mxu0 0.0
        %378 = vmatprep.mubr.f32.mxu0 0.0
        %379 = vmatmul.mubr.f32.gmra.mxu0 %v312
        %v380 = vpop.f32.mrf.mxu0
        %v381 = vadd.f32 0.0, %v380
        %v382 = vpop.f32.mrf.mxu0
        %v383 = vadd.f32 0.0, %v382
        %384 = vdwg.mxu0
        %385 = vst [vmem:[%s283] sm:$0xff] %v381
        %386 = vst [vmem:[%s283 + $0x8] sm:$0xff] %v383
        %v387 = vlaneseq
        %v388 = vand.u32 %v387, 127
        %v389 = vadd.s32 %v388, 128
        %s390 = smul.u32 %s21, 256
        %s391 = ssub.s32 512, %s390
        %v392 = vstv %s391
        %vm393 = vcmp.lt.s32.totalorder %v388, %v392
        %vm394 = vcmp.lt.s32.totalorder %v389, %v392
        %v395 = vsel %vm393, %v381, 0.0
        %v396 = vsel %vm394, %v383, 0.0
        %v397 = vadd.f32 %v395, %v396
        %398 = vadd.xlane.f32.xlu0 %v397
        %v399 = vpop.xlane.xlu0 %398
        %vm400 = vcmask 7168
        %401 = vst.msk [vmem:[%s292] sm:$0xff] %vm400, %v399
        %v402 = vmul.f32 %v395, %v395
        %v403 = vmul.f32 %v396, %v396
        %v404 = vadd.f32 %v402, %v403
        %405 = vadd.xlane.f32.xlu0 %v404
        %v406 = vpop.xlane.xlu0 %405
        %407 = vst.msk [vmem:[%s300] sm:$0xff] %vm400, %v406
        %s408 = smul.u32 2, %s21
        %p409 = scmp.lt.s32.totalorder %s20, 1
        %s410 = scalar_select %p409, %s20, 1
        %p411 = scmp.lt.s32.totalorder %s408, 3
        %s412 = scalar_select %p411, %s408, 3
        %s413 = smul.addr %s410, 4
        %s414 = sadd.s32 %s412, %s413
        %s415 = smul.addr %s414, 8
        %s416 = scalar_lea.vmem %s2, %s415
        %p417 = scmp.lt.s32.totalorder %s20, 1
        %s418 = scalar_select %p417, %s20, 1
        %p419 = scmp.lt.s32.totalorder %s21, 1
        %s420 = scalar_select %p419, %s21, 1
        %s421 = smul.addr %s418, 2
        %s422 = sadd.s32 %s420, %s421
        %s423 = smul.addr %s422, 8
        %s424 = scalar_lea.vmem %s3, %s423
        %p425 = scmp.lt.s32.totalorder %s20, 1
        %s426 = scalar_select %p425, %s20, 1
        %p427 = scmp.lt.s32.totalorder %s21, 1
        %s428 = scalar_select %p427, %s21, 1
        %s429 = smul.addr %s426, 2
        %s430 = sadd.s32 %s428, %s429
        %s431 = smul.addr %s430, 8
        %s432 = scalar_lea.vmem %s4, %s431
        // Predicated region
        $region52: #{down1_forward.2} parent=46 // pred_check
          %p433 = pneg %p97
        $region53: #{down1_forward.2} parent=46 // pred_check_branch
          %435 = sbr.rel (%p433) target = $region55
        $region54: #{down1_forward.2} parent=46 // pred_region
          %s436 = smul.u32 2, %s21
        $region55: #{down1_forward.2} parent=46 // pred_fallthru
          _
        // Predicated region
        $region56: #{down1_forward.2} parent=46 // pred_check
          %p437 = pneg %p125
        $region57: #{down1_forward.2} parent=46 // pred_check_branch
          %439 = sbr.rel (%p437) target = $region59
        $region58: #{down1_forward.2} parent=46 // pred_region
          _
        $region59: #{down1_forward.2} parent=46 // pred_fallthru
          _
        // Predicated region
        $region60: #{down1_forward.2} parent=46 // pred_check
          %p440 = pneg %p153
        $region61: #{down1_forward.2} parent=46 // pred_check_branch
          %442 = sbr.rel (%p440) target = $region63
        $region62: #{down1_forward.2} parent=46 // pred_region
          _
        $region63: #{down1_forward.2} parent=46 // pred_fallthru
          _
      $region47: #{down1_forward.2} parent=5 // pred_fallthru
        _
      %p443 = scmp.le.s32.totalorder 2, %s11
      // Predicated region
      $region64: #{down1_forward.2} parent=5 // pred_check
        %p444 = pneg %p443
      $region65: #{down1_forward.2} parent=5 // pred_check_branch
        %446 = sbr.rel (%p444) target = $region67
      $region66: #{down1_forward.2} parent=5 // pred_region
        %s447 = ssub.s32 %s11, 2
        // Predicated region
        $region68: #{down1_forward.2} parent=66 // pred_check
          %p448 = pneg %p103
        $region69: #{down1_forward.2} parent=66 // pred_check_branch
          %450 = sbr.rel (%p448) target = $region71
        $region70: #{down1_forward.2} parent=66 // pred_region
          %s451 = smul.u32 2, %s23
          %p452 = scmp.lt.s32.totalorder %s22, 1
          %s453 = scalar_select %p452, %s22, 1
          %p454 = scmp.lt.s32.totalorder %s451, 3
          %s455 = scalar_select %p454, %s451, 3
          %s456 = smul.addr %s453, 4
          %s457 = sadd.s32 %s455, %s456
          %s458 = smul.addr %s457, 8
          %s459 = scalar_lea.vmem %s2, %s458
        $region71: #{down1_forward.2} parent=66 // pred_fallthru
          _
        // Predicated region
        $region72: #{down1_forward.2} parent=66 // pred_check
          %p460 = pneg %p131
        $region73: #{down1_forward.2} parent=66 // pred_check_branch
          %462 = sbr.rel (%p460) target = $region75
        $region74: #{down1_forward.2} parent=66 // pred_region
          %p463 = scmp.lt.s32.totalorder %s22, 1
          %s464 = scalar_select %p463, %s22, 1
          %p465 = scmp.lt.s32.totalorder %s23, 1
          %s466 = scalar_select %p465, %s23, 1
          %s467 = smul.addr %s464, 2
          %s468 = sadd.s32 %s466, %s467
          %s469 = smul.addr %s468, 8
          %s470 = scalar_lea.vmem %s3, %s469
        $region75: #{down1_forward.2} parent=66 // pred_fallthru
          _
        // Predicated region
        $region76: #{down1_forward.2} parent=66 // pred_check
          %p471 = pneg %p159
        $region77: #{down1_forward.2} parent=66 // pred_check_branch
          %473 = sbr.rel (%p471) target = $region79
        $region78: #{down1_forward.2} parent=66 // pred_region
          %p474 = scmp.lt.s32.totalorder %s22, 1
          %s475 = scalar_select %p474, %s22, 1
          %p476 = scmp.lt.s32.totalorder %s23, 1
          %s477 = scalar_select %p476, %s23, 1
          %s478 = smul.addr %s475, 2
          %s479 = sadd.s32 %s477, %s478
          %s480 = smul.addr %s479, 8
          %s481 = scalar_lea.vmem %s4, %s480
        $region79: #{down1_forward.2} parent=66 // pred_fallthru
          _
      $region67: #{down1_forward.2} parent=5 // pred_fallthru
        _
    $region6: #{down1_forward.2} parent=1 // loop_footer
      %s15 = sadd.s32 1, %s11
    $region7: #{down1_forward.2} parent=1 // loop_footer_branch
      %10 = sbr.rel target = $region3
    $region8: #{down1_forward.2} parent=1 // loop_exit
      _

// kernel: down1_forward.3
$region0: #{down1_forward.3}
  #allocation0 [shape = 'u32[]', space=smem, size = 0x4, offset = 0x4, fixed_abs, tag = 'smem constant byte address 0x4 - core index']
  #allocation1 [shape = 'u32[144,128]{1,0:T(1,128)}', space=vmem, size = 0x12000, scoped, tag = 'internal scratch']
  %s0 = inlined_call_operand.vmem [shape: f32[2,8,512], index: 0, kind: input, shape index: {}, may-alias: {0,3}]
  %s1 = inlined_call_operand.vmem [shape: f32[8,1], index: 1, kind: input, shape index: {}]
  %s2 = inlined_call_operand.vmem [shape: f32[8,1], index: 2, kind: input, shape index: {}]
  %s3 = inlined_call_operand.vmem [shape: f32[2,8,512], index: 3, kind: output, shape index: {}, may-alias: {0,3}]
  %s4 = sld [smem:[#allocation0]]
  $region45: #{down1_forward.3} parent=0
    _
  %s6 = ssub.s32 1, %s4
  %s7 = scalar_select 0, %s6, %s4
  loop: start=0, step=1, limit=6
  $region2: #{down1_forward.3} parent=0 // loop_pre_header
    _
  $region3: #{down1_forward.3} parent=0 // loop_header
    %s9 = sphi 0, %s13
    %p10 = scmp.ge.s32.totalorder %s9, 6
    %s16 = sphi 0, %s28
    %s17 = sphi 0, %s24
    %s18 = sphi 0, %s16
    %s19 = sphi 0, %s17
    %s20 = sphi 0, %s18
    %s21 = sphi 0, %s19
    %s33 = sphi 0, %s35
    %s36 = sphi 0, %s33
    %s37 = sphi 0, %s36
    %s53 = sphi 0, %s37
    %s57 = sphi 0, %s57
    %s59 = sphi 0, %s57
    %s60 = sphi 0, %s59
    %s74 = sphi 0, %s60
    %s78 = sphi 0, %s78
    %s80 = sphi 0, %s78
    %s81 = sphi 0, %s80
    %s95 = sphi 0, %s81
    %s103 = sphi 0, %s105
    %s106 = sphi 0, %s103
    %s107 = sphi 0, %s106
    %s123 = sphi 0, %s107
  $region4: #{down1_forward.3} parent=0 // loop_header_branch
    %12 = sbr.rel (%p10) target = $region8
  $region5: #{down1_forward.3} parent=0 // loop_body
    %s14 = ssub.s32 %s9, 1
    %s15 = ssub.s32 %s9, 2
    %s22 = sadd.s32 1, %s17
    %p23 = scmp.ge.s32.totalorder %s22, 2
    %s24 = scalar_select %p23, 0, %s22
    %s25 = sadd.s32 1, %s16
    %s26 = scalar_select %p23, %s25, %s16
    %p27 = scmp.ge.s32.totalorder %s26, 2
    %s28 = scalar_select %p27, 0, %s26
    %s29 = ssub.s32 %s16, %s28
    %s30 = ssub.s32 %s17, %s24
    %s31 = sor.u32 %s29, %s30
    %p32 = scmp.eq.s32.totalorder %s31, 0
    %s34 = sadd.s32 %s33, 1
    %s35 = scalar_select %p32, %s33, %s34
    %p38 = pneg %p32
    %p39 = scmp.eq.s32.totalorder %s9, 3
    %p40 = por %p38, %p39
    %p41 = scmp.ne.s32.totalorder %s33, %s36
    %p42 = scmp.eq.s32.totalorder %s9, 0
    %p43 = por %p41, %p42
    %p44 = scmp.ne.s32.totalorder %s33, %s36
    %p45 = scmp.eq.s32.totalorder %s14, 3
    %p46 = por %p44, %p45
    %p47 = scmp.ne.s32.totalorder %s36, %s37
    %p48 = scmp.eq.s32.totalorder %s14, 0
    %p49 = por %p47, %p48
    %p50 = scmp.ne.s32.totalorder %s36, %s37
    %p51 = scmp.eq.s32.totalorder %s15, 3
    %p52 = por %p50, %p51
    %p54 = scmp.ne.s32.totalorder %s37, %s53
    %p55 = scmp.eq.s32.totalorder %s15, 0
    %p56 = por %p54, %p55
    %s58 = sadd.s32 %s57, 1
    %p61 = scmp.eq.s32.totalorder %s9, 3
    %p62 = scmp.ne.s32.totalorder %s57, %s59
    %p63 = scmp.eq.s32.totalorder %s9, 0
    %p64 = por %p62, %p63
    %p65 = scmp.ne.s32.totalorder %s57, %s59
    %p66 = scmp.eq.s32.totalorder %s14, 3
    %p67 = por %p65, %p66
    %p68 = scmp.ne.s32.totalorder %s59, %s60
    %p69 = scmp.eq.s32.totalorder %s14, 0
    %p70 = por %p68, %p69
    %p71 = scmp.ne.s32.totalorder %s59, %s60
    %p72 = scmp.eq.s32.totalorder %s15, 3
    %p73 = por %p71, %p72
    %p75 = scmp.ne.s32.totalorder %s60, %s74
    %p76 = scmp.eq.s32.totalorder %s15, 0
    %p77 = por %p75, %p76
    %s79 = sadd.s32 %s78, 1
    %p82 = scmp.eq.s32.totalorder %s9, 3
    %p83 = scmp.ne.s32.totalorder %s78, %s80
    %p84 = scmp.eq.s32.totalorder %s9, 0
    %p85 = por %p83, %p84
    %p86 = scmp.ne.s32.totalorder %s78, %s80
    %p87 = scmp.eq.s32.totalorder %s14, 3
    %p88 = por %p86, %p87
    %p89 = scmp.ne.s32.totalorder %s80, %s81
    %p90 = scmp.eq.s32.totalorder %s14, 0
    %p91 = por %p89, %p90
    %p92 = scmp.ne.s32.totalorder %s80, %s81
    %p93 = scmp.eq.s32.totalorder %s15, 3
    %p94 = por %p92, %p93
    %p96 = scmp.ne.s32.totalorder %s81, %s95
    %p97 = scmp.eq.s32.totalorder %s15, 0
    %p98 = por %p96, %p97
    %s99 = ssub.s32 %s16, %s28
    %s100 = ssub.s32 %s17, %s24
    %s101 = sor.u32 %s99, %s100
    %p102 = scmp.eq.s32.totalorder %s101, 0
    %s104 = sadd.s32 %s103, 1
    %s105 = scalar_select %p102, %s103, %s104
    %p108 = pneg %p102
    %p109 = scmp.eq.s32.totalorder %s9, 3
    %p110 = por %p108, %p109
    %p111 = scmp.ne.s32.totalorder %s103, %s106
    %p112 = scmp.eq.s32.totalorder %s9, 0
    %p113 = por %p111, %p112
    %p114 = scmp.ne.s32.totalorder %s103, %s106
    %p115 = scmp.eq.s32.totalorder %s14, 3
    %p116 = por %p114, %p115
    %p117 = scmp.ne.s32.totalorder %s106, %s107
    %p118 = scmp.eq.s32.totalorder %s14, 0
    %p119 = por %p117, %p118
    %p120 = scmp.ne.s32.totalorder %s106, %s107
    %p121 = scmp.eq.s32.totalorder %s15, 3
    %p122 = por %p120, %p121
    %p124 = scmp.ne.s32.totalorder %s107, %s123
    %p125 = scmp.eq.s32.totalorder %s15, 0
    %p126 = por %p124, %p125
    %p127 = scmp.le.s32.totalorder 1, %s9
    %p128 = scmp.lt.s32.totalorder %s9, 5
    %p129 = pnand %p127, %p128
    %p130 = pneg %p129
    // Predicated region
    $region9: #{down1_forward.3} parent=5 // pred_check
      _
    $region10: #{down1_forward.3} parent=5 // pred_check_branch
      %132 = sbr.rel (%p129) target = $region12
    $region11: #{down1_forward.3} parent=5 // pred_region
      %s133 = ssub.s32 %s9, 1
      // Predicated region
      $region13: #{down1_forward.3} parent=11 // pred_check
        %p134 = pneg %p70
      $region14: #{down1_forward.3} parent=11 // pred_check_branch
        %136 = sbr.rel (%p134) target = $region16
      $region15: #{down1_forward.3} parent=11 // pred_region
        _
      $region16: #{down1_forward.3} parent=11 // pred_fallthru
        _
      // Predicated region
      $region17: #{down1_forward.3} parent=11 // pred_check
        %p137 = pneg %p91
      $region18: #{down1_forward.3} parent=11 // pred_check_branch
        %139 = sbr.rel (%p137) target = $region20
      $region19: #{down1_forward.3} parent=11 // pred_region
        _
      $region20: #{down1_forward.3} parent=11 // pred_fallthru
        _
    $region12: #{down1_forward.3} parent=5 // pred_fallthru
      _
    %p140 = scmp.lt.s32.totalorder %s9, 4
    // Predicated region
    $region21: #{down1_forward.3} parent=5 // pred_check
      %p141 = pneg %p140
    $region22: #{down1_forward.3} parent=5 // pred_check_branch
      %143 = sbr.rel (%p141) target = $region24
    $region23: #{down1_forward.3} parent=5 // pred_region
      // Predicated region
      $region25: #{down1_forward.3} parent=23 // pred_check
        %p144 = pneg %p43
      $region26: #{down1_forward.3} parent=23 // pred_check_branch
        %146 = sbr.rel (%p144) target = $region28
      $region27: #{down1_forward.3} parent=23 // pred_region
        %s147 = smul.u32 2, %s17
        %p148 = scmp.lt.s32.totalorder %s16, 1
        %s149 = scalar_select %p148, %s16, 1
        %p150 = scmp.lt.s32.totalorder %s147, 3
        %s151 = scalar_select %p150, %s147, 3
        %s152 = smul.addr %s149, 4
        %s153 = sadd.s32 %s151, %s152
        %s154 = smul.addr %s153, 8
        %s155 = scalar_lea.vmem %s0, %s154
        %s156 = smul.u32 2, %s17
      $region28: #{down1_forward.3} parent=23 // pred_fallthru
        _
    $region24: #{down1_forward.3} parent=5 // pred_fallthru
      _
    %p157 = scmp.le.s32.totalorder 1, %s9
    %p158 = scmp.lt.s32.totalorder %s9, 5
    %p159 = pnand %p157, %p158
    %p160 = pneg %p159
    // Predicated region
    $region29: #{down1_forward.3} parent=5 // pred_check
      _
    $region30: #{down1_forward.3} parent=5 // pred_check_branch
      %162 = sbr.rel (%p159) target = $region32
    $region31: #{down1_forward.3} parent=5 // pred_region
      %s163 = ssub.s32 %s9, 1
      %s164 = smul.u32 2, %s19
      %p165 = scmp.lt.s32.totalorder %s18, 1
      %s166 = scalar_select %p165, %s18, 1
      %p167 = scmp.lt.s32.totalorder %s164, 3
      %s168 = scalar_select %p167, %s164, 3
      %s169 = smul.addr %s166, 4
      %s170 = sadd.s32 %s168, %s169
      %s171 = smul.addr %s170, 8
      %s172 = scalar_lea.vmem %s0, %s171
      %p173 = pneg %p49
      %p174 = pneg %p46
      %p175 = pneg %p70
      %p176 = pneg %p67
      %p177 = pneg %p91
      %p178 = pneg %p88
      %p179 = pneg %p119
      %p180 = pneg %p116
      %s181 = smul.u32 2, %s19
      %p182 = scmp.lt.s32.totalorder %s18, 1
      %s183 = scalar_select %p182, %s18, 1
      %p184 = scmp.lt.s32.totalorder %s181, 3
      %s185 = scalar_select %p184, %s181, 3
      %s186 = smul.addr %s183, 4
      %s187 = sadd.s32 %s185, %s186
      %s188 = smul.addr %s187, 8
      %s189 = scalar_lea.vmem %s3, %s188
      %s190 = smul.u32 2, %s19
      %p191 = scmp.lt.s32.totalorder %s18, 1
      %s192 = scalar_select %p191, %s18, 1
      %p193 = scmp.lt.s32.totalorder %s190, 3
      %s194 = scalar_select %p193, %s190, 3
      %s195 = smul.addr %s192, 4
      %s196 = sadd.s32 %s194, %s195
      %s197 = smul.addr %s196, 8
      %s198 = scalar_lea.vmem %s0, %s197
      %s199 = smul.u32 2, %s19
      %s200 = smul.u32 2, %s19
      %p201 = scmp.lt.s32.totalorder %s18, 1
      %s202 = scalar_select %p201, %s18, 1
      %p203 = scmp.lt.s32.totalorder %s200, 3
      %s204 = scalar_select %p203, %s200, 3
      %s205 = smul.addr %s202, 4
      %s206 = sadd.s32 %s204, %s205
      %s207 = smul.addr %s206, 8
      %s208 = scalar_lea.vmem %s3, %s207
      %s209 = smul.u32 2, %s19
      %v210 = vld [vmem:[%s198] sm:$0xff]
      %v211 = vld [vmem:[%s198 + $0x8] sm:$0xff]
      %v212 = vld [vmem:[%s1] sm:$0xff]
      %214 = vset.pattern.permute.xlu0 0
      %215 = vperm.xlu0 %214, %v212
      %v216 = vpop.permute.xlu0 %215
      %v218 = vmul.f32 %v210, %v216
      %v219 = vmul.f32 %v211, %v216
      %v220 = vld [vmem:[%s2] sm:$0xff]
      %222 = vset.pattern.permute.xlu0 0
      %223 = vperm.xlu0 %222, %v220
      %v224 = vpop.permute.xlu0 %223
      %v226 = vadd.f32 %v218, %v224
      %v227 = vadd.f32 %v219, %v224
      %v228 = vmax.f32 %v226, 0.0
      %v229 = vmax.f32 %v227, 0.0
      %230 = vst [vmem:[%s208] sm:$0xff] %v228
      %231 = vst [vmem:[%s208 + $0x8] sm:$0xff] %v229
      %s232 = smul.u32 2, %s19
      %p233 = scmp.lt.s32.totalorder %s18, 1
      %s234 = scalar_select %p233, %s18, 1
      %p235 = scmp.lt.s32.totalorder %s232, 3
      %s236 = scalar_select %p235, %s232, 3
      %s237 = smul.addr %s234, 4
      %s238 = sadd.s32 %s236, %s237
      %s239 = smul.addr %s238, 8
      %s240 = scalar_lea.vmem %s3, %s239
      // Predicated region
      $region33: #{down1_forward.3} parent=31 // pred_check
        %p241 = pneg %p116
      $region34: #{down1_forward.3} parent=31 // pred_check_branch
        %243 = sbr.rel (%p241) target = $region36
      $region35: #{down1_forward.3} parent=31 // pred_region
        %s244 = smul.u32 2, %s19
      $region36: #{down1_forward.3} parent=31 // pred_fallthru
        _
    $region32: #{down1_forward.3} parent=5 // pred_fallthru
      _
    %p245 = scmp.le.s32.totalorder 2, %s9
    // Predicated region
    $region37: #{down1_forward.3} parent=5 // pred_check
      %p246 = pneg %p245
    $region38: #{down1_forward.3} parent=5 // pred_check_branch
      %248 = sbr.rel (%p246) target = $region40
    $region39: #{down1_forward.3} parent=5 // pred_region
      %s249 = ssub.s32 %s9, 2
      // Predicated region
      $region41: #{down1_forward.3} parent=39 // pred_check
        %p250 = pneg %p122
      $region42: #{down1_forward.3} parent=39 // pred_check_branch
        %252 = sbr.rel (%p250) target = $region44
      $region43: #{down1_forward.3} parent=39 // pred_region
        %s253 = smul.u32 2, %s21
        %p254 = scmp.lt.s32.totalorder %s20, 1
        %s255 = scalar_select %p254, %s20, 1
        %p256 = scmp.lt.s32.totalorder %s253, 3
        %s257 = scalar_select %p256, %s253, 3
        %s258 = smul.addr %s255, 4
        %s259 = sadd.s32 %s257, %s258
        %s260 = smul.addr %s259, 8
        %s261 = scalar_lea.vmem %s3, %s260
      $region44: #{down1_forward.3} parent=39 // pred_fallthru
        _
    $region40: #{down1_forward.3} parent=5 // pred_fallthru
      _
  $region6: #{down1_forward.3} parent=0 // loop_footer
    %s13 = sadd.s32 1, %s9
  $region7: #{down1_forward.3} parent=0 // loop_footer_branch
    %8 = sbr.rel target = $region3
  $region8: #{down1_forward.3} parent=0 // loop_exit
    _

</llo_original>
